<compile_context>
chip_gen: v5e
topology: v5e:2x2
jax: 0.10.0
libtpu: 0.0.40
codegen_flags: <defaults>
</compile_context>

<pallas_src>
import functools

import jax
import jax.numpy as jnp
from jax import lax
from jax.experimental import pallas as pl
from jax.experimental.pallas import tpu as pltpu


def _downsampler_kernel(p_ref, w_ref, scale_ref, bias_ref, o_ref, *,
                        cin, conv_cout, use_pool):
    # p_ref:     (1, 9*cin, Ts)   im2col slab (tap-major, channel-minor rows)
    # w_ref:     (conv_cout, 9*cin)  conv weights with BN scale pre-folded
    # scale_ref: (noutput, 1)     BN scale (only pool rows used in-kernel)
    # bias_ref:  (noutput, 1)     folded BN bias (conv bias already folded in)
    # o_ref:     (1, noutput, Ts) NC(HW) output tile (spatial on lanes)
    p = p_ref[0]                       # (9*cin, Ts)
    bias = bias_ref[...]               # (noutput, 1) f32

    # --- 3x3 stride-2 conv: ONE MXU matmul with K = 9*cin -------------------
    # BN scale already folded into w_ref, so the epilogue is add-bias + relu.
    conv = jnp.dot(w_ref[...], p, preferred_element_type=jnp.float32)
    y_c = conv + bias[:conv_cout, :]
    o_ref[0, :conv_cout, :] = jnp.maximum(y_c, 0.0).astype(o_ref.dtype)

    # --- 2x2 stride-2 maxpool branch: taps (1,1),(1,2),(2,1),(2,2) ----------
    if use_pool:
        scale = scale_ref[...]         # (noutput, 1) f32

        def tap(t):
            return p[t * cin:(t + 1) * cin, :].astype(jnp.float32)

        pool = jnp.maximum(jnp.maximum(tap(4), tap(5)),
                           jnp.maximum(tap(7), tap(8)))
        y_p = pool * scale[conv_cout:, :] + bias[conv_cout:, :]
        o_ref[0, conv_cout:, :] = jnp.maximum(y_p, 0.0).astype(o_ref.dtype)


def _pick_spatial_tile(S, bytes_per_col, budget=8 << 20):
    """Largest spatial tile that divides S, is a multiple of 128 (or all of S),
    and keeps the double-buffered per-step working set under `budget`."""
    if S % 128 != 0:
        return S
    limit = max(128, budget // max(bytes_per_col, 1))
    best = 128
    for t in range(128, S + 1, 128):
        if S % t == 0 and t <= limit:
            best = t
    return best


def downsampler_block(x_nchw, params, ninput, noutput, *, compute_dtype=None):
    """Pallas implementation of DownsamplerBlock.forward (NCHW in / NCHW out)."""
    w, b, gamma, beta, rmean, rvar = params
    N, C, H, W = x_nchw.shape
    assert C == ninput and H % 2 == 0 and W % 2 == 0
    Ho, Wo = H // 2, W // 2
    S = Ho * Wo
    use_pool = ninput < noutput
    conv_cout = (noutput - ninput) if use_pool else noutput
    cdt = jnp.dtype(compute_dtype) if compute_dtype is not None else x_nchw.dtype

    # --- wrapper-side im2col (XLA glue): (N, 9*cin, Ho*Wo) ------------------
    x_pad = jnp.pad(x_nchw, ((0, 0), (0, 0), (1, 1), (1, 1)))
    taps = [x_pad[:, :, kh:kh + 2 * Ho:2, kw:kw + 2 * Wo:2]
            for kh in range(3) for kw in range(3)]
    patches = jnp.stack(taps, axis=1).reshape(N, 9 * ninput, S).astype(cdt)

    # Fold BN (inference running stats) into conv weights / bias:
    #   conv rows: (W.p + b) * s + t  ==  (W*s).p + (b*s + t)
    #   pool rows: max(taps) * s + t     (scale must stay after the max)
    eps = 1e-5
    inv_std = gamma / jnp.sqrt(rvar + eps)                     # (noutput,)
    shift = beta - rmean * inv_std

    # Conv weight OIHW -> (conv_cout, 9*cin), matching patch row ordering,
    # with per-output-channel BN scale folded in.
    w2d = jnp.transpose(w, (0, 2, 3, 1)).reshape(conv_cout, 9 * ninput)
    w2d = (w2d * inv_std[:conv_cout, None]).astype(cdt)

    shift = shift.at[:conv_cout].add(inv_std[:conv_cout] * b)  # fold conv bias
    scale = inv_std.reshape(noutput, 1).astype(jnp.float32)
    bias = shift.reshape(noutput, 1).astype(jnp.float32)

    # --- spatial tiling so per-step working set fits comfortably in VMEM ----
    bytes_per_col = 2 * (9 * ninput * jnp.dtype(cdt).itemsize
                         + noutput * jnp.dtype(x_nchw.dtype).itemsize)
    Ts = _pick_spatial_tile(S, bytes_per_col)

    kernel = functools.partial(_downsampler_kernel, cin=ninput,
                               conv_cout=conv_cout, use_pool=use_pool)

    out_flat = pl.pallas_call(
        kernel,
        out_shape=jax.ShapeDtypeStruct((N, noutput, S), x_nchw.dtype),
        grid_spec=pltpu.PrefetchScalarGridSpec(
            num_scalar_prefetch=0,
            grid=(N, S // Ts),
            in_specs=[
                pl.BlockSpec((1, 9 * ninput, Ts), lambda n, s: (n, 0, s)),
                pl.BlockSpec((conv_cout, 9 * ninput), lambda n, s: (0, 0)),
                pl.BlockSpec((noutput, 1), lambda n, s: (0, 0)),
                pl.BlockSpec((noutput, 1), lambda n, s: (0, 0)),
            ],
            out_specs=pl.BlockSpec((1, noutput, Ts), lambda n, s: (n, 0, s)),
        ),
        compiler_params=pltpu.CompilerParams(
            dimension_semantics=("parallel", "parallel"),
            vmem_limit_bytes=32 << 20),
    )(patches, w2d, scale, bias)

    return out_flat.reshape(N, noutput, Ho, Wo)   # already NCHW: no transpose


def reference(x_nchw, params, ninput, noutput):
    """Pure-JAX reference mirroring the PyTorch forward (eval-mode BN)."""
    w, b, gamma, beta, rmean, rvar = params
    conv = lax.conv_general_dilated(
        x_nchw, w, window_strides=(2, 2), padding=((1, 1), (1, 1)),
        dimension_numbers=('NCHW', 'OIHW', 'NCHW'))
    conv = conv + b[None, :, None, None]
    if ninput < noutput:
        pool = lax.reduce_window(x_nchw, -jnp.inf, lax.max,
                                 (1, 1, 2, 2), (1, 1, 2, 2), 'VALID')
        out = jnp.concatenate([conv, pool], axis=1)
    else:
        out = conv
    eps = 1e-5
    scale = gamma / jnp.sqrt(rvar + eps)
    shift = beta - rmean * scale
    out = out * scale[None, :, None, None] + shift[None, :, None, None]
    return jnp.maximum(out, 0.0)


def make_params(key, ninput, noutput):
    conv_cout = (noutput - ninput) if ninput < noutput else noutput
    ks = jax.random.split(key, 6)
    bound = 1.0 / ((ninput * 9) ** 0.5)
    w = jax.random.uniform(ks[0], (conv_cout, ninput, 3, 3), jnp.float32, -bound, bound)
    b = jax.random.uniform(ks[1], (conv_cout,), jnp.float32, -bound, bound)
    gamma = jax.random.uniform(ks[2], (noutput,), jnp.float32, 0.5, 1.5)
    beta = 0.1 * jax.random.normal(ks[3], (noutput,), jnp.float32)
    rmean = 0.1 * jax.random.normal(ks[4], (noutput,), jnp.float32)
    rvar = jax.random.uniform(ks[5], (noutput,), jnp.float32, 0.5, 1.5)
    return (w, b, gamma, beta, rmean, rvar)


if __name__ == "__main__":
    key = jax.random.PRNGKey(0)
    k1, k2, kx1, kx2 = jax.random.split(key, 4)

    # Case 1: ninput < noutput  -> cat([conv(x), maxpool(x)], dim=1)
    ninput, noutput = 4, 8
    x = jax.random.normal(kx1, (2, ninput, 16, 16), jnp.float32)
    params = make_params(k1, ninput, noutput)
    out = jax.block_until_ready(downsampler_block(x, params, ninput, noutput))
    ref = reference(x, params, ninput, noutput)
    assert out.shape == (2, noutput, 8, 8)
    assert jnp.allclose(out, ref, atol=1e-2, rtol=1e-2), \
        float(jnp.max(jnp.abs(out - ref)))

    # Case 2: ninput >= noutput -> conv only
    ninput2, noutput2 = 8, 6
    x2 = jax.random.normal(kx2, (2, ninput2, 16, 16), jnp.float32)
    params2 = make_params(k2, ninput2, noutput2)
    out2 = jax.block_until_ready(downsampler_block(x2, params2, ninput2, noutput2))
    ref2 = reference(x2, params2, ninput2, noutput2)
    assert out2.shape == (2, noutput2, 8, 8)
    assert jnp.allclose(out2, ref2, atol=1e-2, rtol=1e-2), \
        float(jnp.max(jnp.abs(out2 - ref2)))

    # Case 3: bf16 operands (f32 MXU accumulation + f32 BN/ReLU epilogue)
    out3 = jax.block_until_ready(
        downsampler_block(x, params, ninput, noutput, compute_dtype=jnp.bfloat16))
    assert out3.shape == (2, noutput, 8, 8)
    assert jnp.allclose(out3, ref, atol=1e-1, rtol=1e-1), \
        float(jnp.max(jnp.abs(out3 - ref)))

    print("KERNEL_OK")
</pallas_src>

<mosaic_0001>
module attributes {stable_mosaic.version = 11 : i64} {
  func.func @_downsampler_kernel(%arg0: i32, %arg1: i32, %arg2: memref<1x36x64xf32, #tpu.memory_space<vmem>>, %arg3: memref<4x36xf32, #tpu.memory_space<vmem>>, %arg4: memref<8x1xf32, #tpu.memory_space<vmem>>, %arg5: memref<8x1xf32, #tpu.memory_space<vmem>>, %arg6: memref<1x8x64xf32, #tpu.memory_space<vmem>>) attributes {dimension_semantics = [#tpu.dimension_semantics<parallel>, #tpu.dimension_semantics<parallel>], iteration_bounds = array<i64: 2, 1>, scalar_prefetch = 0 : i64, scratch_operands = 0 : i64, tpu.core_type = #tpu.core_type<tc>, window_params = [{transform_indices = @transform_0, window_bounds = array<i64: 1, 36, 64>}, {pipeline_mode = #tpu.pipeline_mode<synchronous>, transform_indices = @transform_1, window_bounds = array<i64: 4, 36>}, {pipeline_mode = #tpu.pipeline_mode<synchronous>, transform_indices = @transform_2, window_bounds = array<i64: 8, 1>}, {pipeline_mode = #tpu.pipeline_mode<synchronous>, transform_indices = @transform_3, window_bounds = array<i64: 8, 1>}, {transform_indices = @transform_4, window_bounds = array<i64: 1, 8, 64>}]} {
    %c0 = arith.constant 0 : index
    %c0_0 = arith.constant 0 : index
    %c0_1 = arith.constant 0 : index
    %0 = vector.load %arg2[%c0, %c0_0, %c0_1] : memref<1x36x64xf32, #tpu.memory_space<vmem>>, vector<1x36x64xf32>
    %1 = vector.shape_cast %0 : vector<1x36x64xf32> to vector<36x64xf32>
    %c0_2 = arith.constant 0 : index
    %c0_3 = arith.constant 0 : index
    %2 = vector.load %arg5[%c0_2, %c0_3] : memref<8x1xf32, #tpu.memory_space<vmem>>, vector<8x1xf32>
    %c0_4 = arith.constant 0 : index
    %c0_5 = arith.constant 0 : index
    %3 = vector.load %arg3[%c0_4, %c0_5] : memref<4x36xf32, #tpu.memory_space<vmem>>, vector<4x36xf32>
    %cst = arith.constant dense<0.000000e+00> : vector<4x64xf32>
    %4 = tpu.matmul %3, %1, %cst {dimension_numbers = #tpu.dot_dimension_numbers<[1], [0], [0], [1], [0, 0, 1, 1], [], []>} : vector<4x36xf32>, vector<36x64xf32>, vector<4x64xf32> -> vector<4x64xf32>
    %5 = vector.extract_strided_slice %2 {offsets = [0, 0], sizes = [4, 1], strides = [1, 1]} : vector<8x1xf32> to vector<4x1xf32>
    %6 = vector.broadcast %5 : vector<4x1xf32> to vector<4x64xf32>
    %7 = arith.addf %4, %6 : vector<4x64xf32>
    %cst_6 = arith.constant 0.000000e+00 : f32
    %8 = vector.broadcast %cst_6 : f32 to vector<4x64xf32>
    %9 = arith.maximumf %7, %8 : vector<4x64xf32>
    %c0_7 = arith.constant 0 : index
    %c0_8 = arith.constant 0 : index
    %c0_9 = arith.constant 0 : index
    %10 = vector.load %arg6[%c0_7, %c0_8, %c0_9] : memref<1x8x64xf32, #tpu.memory_space<vmem>>, vector<1x4x64xf32>
    %11 = vector.shape_cast %10 : vector<1x4x64xf32> to vector<4x64xf32>
    %12 = vector.shape_cast %9 : vector<4x64xf32> to vector<1x4x64xf32>
    tpu.vector_store %arg6[%c0_7, %c0_8, %c0_9], %12 {strides = array<i32>} : memref<1x8x64xf32, #tpu.memory_space<vmem>>, vector<1x4x64xf32>,
    %c0_10 = arith.constant 0 : index
    %c0_11 = arith.constant 0 : index
    %13 = vector.load %arg4[%c0_10, %c0_11] : memref<8x1xf32, #tpu.memory_space<vmem>>, vector<8x1xf32>
    %14 = vector.extract_strided_slice %1 {offsets = [16, 0], sizes = [4, 64], strides = [1, 1]} : vector<36x64xf32> to vector<4x64xf32>
    %15 = vector.extract_strided_slice %1 {offsets = [20, 0], sizes = [4, 64], strides = [1, 1]} : vector<36x64xf32> to vector<4x64xf32>
    %16 = arith.maximumf %14, %15 : vector<4x64xf32>
    %17 = vector.extract_strided_slice %1 {offsets = [28, 0], sizes = [4, 64], strides = [1, 1]} : vector<36x64xf32> to vector<4x64xf32>
    %18 = vector.extract_strided_slice %1 {offsets = [32, 0], sizes = [4, 64], strides = [1, 1]} : vector<36x64xf32> to vector<4x64xf32>
    %19 = arith.maximumf %17, %18 : vector<4x64xf32>
    %20 = arith.maximumf %16, %19 : vector<4x64xf32>
    %21 = vector.extract_strided_slice %13 {offsets = [4, 0], sizes = [4, 1], strides = [1, 1]} : vector<8x1xf32> to vector<4x1xf32>
    %22 = vector.broadcast %21 : vector<4x1xf32> to vector<4x64xf32>
    %23 = arith.mulf %20, %22 : vector<4x64xf32>
    %24 = vector.extract_strided_slice %2 {offsets = [4, 0], sizes = [4, 1], strides = [1, 1]} : vector<8x1xf32> to vector<4x1xf32>
    %25 = vector.broadcast %24 : vector<4x1xf32> to vector<4x64xf32>
    %26 = arith.addf %23, %25 : vector<4x64xf32>
    %cst_12 = arith.constant 0.000000e+00 : f32
    %27 = vector.broadcast %cst_12 : f32 to vector<4x64xf32>
    %28 = arith.maximumf %26, %27 : vector<4x64xf32>
    %c0_13 = arith.constant 0 : index
    %c4 = arith.constant 4 : index
    %c0_14 = arith.constant 0 : index
    %29 = vector.load %arg6[%c0_13, %c4, %c0_14] : memref<1x8x64xf32, #tpu.memory_space<vmem>>, vector<1x4x64xf32>
    %30 = vector.shape_cast %29 : vector<1x4x64xf32> to vector<4x64xf32>
    %31 = vector.shape_cast %28 : vector<4x64xf32> to vector<1x4x64xf32>
    tpu.vector_store %arg6[%c0_13, %c4, %c0_14], %31 {strides = array<i32>} : memref<1x8x64xf32, #tpu.memory_space<vmem>>, vector<1x4x64xf32>,
    return
  }
  func.func @transform_0(%arg0: i32, %arg1: i32) -> (i32, i32, i32) {
    %c0_i32 = arith.constant 0 : i32
    %c0_i32_0 = arith.constant 0 : i32
    return %arg0, %c0_i32, %arg1 : i32, i32, i32
  }
  func.func @transform_1(%arg0: i32, %arg1: i32) -> (i32, i32) {
    %c0_i32 = arith.constant 0 : i32
    %c0_i32_0 = arith.constant 0 : i32
    %c0_i32_1 = arith.constant 0 : i32
    return %c0_i32, %c0_i32_0 : i32, i32
  }
  func.func @transform_2(%arg0: i32, %arg1: i32) -> (i32, i32) {
    %c0_i32 = arith.constant 0 : i32
    %c0_i32_0 = arith.constant 0 : i32
    %c0_i32_1 = arith.constant 0 : i32
    return %c0_i32, %c0_i32_0 : i32, i32
  }
  func.func @transform_3(%arg0: i32, %arg1: i32) -> (i32, i32) {
    %c0_i32 = arith.constant 0 : i32
    %c0_i32_0 = arith.constant 0 : i32
    %c0_i32_1 = arith.constant 0 : i32
    return %c0_i32, %c0_i32_0 : i32, i32
  }
  func.func @transform_4(%arg0: i32, %arg1: i32) -> (i32, i32, i32) {
    %c0_i32 = arith.constant 0 : i32
    %c0_i32_0 = arith.constant 0 : i32
    return %arg0, %c0_i32, %arg1 : i32, i32, i32
  }
}

</mosaic_0001>

<llo_original>
// kernel: tpu_custom_call.1
$region0: #{tpu_custom_call.1}
  #allocation0 [shape = 'u32[]', space=smem, size = 0x4, offset = 0x4, fixed_abs, tag = 'smem constant byte address 0x4 - core index']
  #allocation1 [shape = 'u32[72,128]{1,0:T(1,128)}', space=vmem, size = 0x9000, scoped, tag = 'internal scratch']
  %s0 = inlined_call_operand.vmem [shape: f32[2,36,64], index: 0, kind: input, shape index: {}]
  %s1 = inlined_call_operand.vmem [shape: f32[4,36], index: 1, kind: input, shape index: {}]
  %s2 = inlined_call_operand.vmem [shape: f32[8,1], index: 2, kind: input, shape index: {}]
  %s3 = inlined_call_operand.vmem [shape: f32[8,1], index: 3, kind: input, shape index: {}]
  %s4 = inlined_call_operand.hbm [shape: f32[2,8,64], index: 4, kind: output, shape index: {}]
  %s5 = sld [smem:[#allocation0]]
  $region49: #{tpu_custom_call.1} parent=0
    _
  %s7 = ssub.s32 1, %s5
  %s8 = scalar_select 0, %s7, %s5
  $region1: #{tpu_custom_call.1} parent=0
    #allocation2 [shape = 'u8[8192]{0}', space=vmem, size = 0x2000, scoped, tag = 'output window, operand 0']
    #allocation3 [shape = 's32[2]{0}', space=sflag, size = 0x8, scoped, tag = 'scoped memory for tpu_custom_call.1']
    %9 = vsyncpa [#allocation3], 0
    %s10 = scalar_lea.sflag [#allocation3], 1
    %11 = vsyncpa %s10, 0
    loop: start=0, step=1, limit=4
    $region2: #{tpu_custom_call.1} parent=1 // loop_pre_header
      _
    $region3: #{tpu_custom_call.1} parent=1 // loop_header
      %s13 = sphi 0, %s17
      %p14 = scmp.ge.s32.totalorder %s13, 4
      %s20 = sphi 0, %s32
      %s21 = sphi 0, %s28
      %s22 = sphi 0, %s20
      %s23 = sphi 0, %s21
      %s24 = sphi 0, %s22
      %s25 = sphi 0, %s23
      %s37 = sphi 0, %s39
      %s40 = sphi 0, %s37
      %s41 = sphi 0, %s40
      %s57 = sphi 0, %s41
      %s61 = sphi 0, %s61
      %s63 = sphi 0, %s61
      %s64 = sphi 0, %s63
      %s78 = sphi 0, %s64
      %s82 = sphi 0, %s82
      %s84 = sphi 0, %s82
      %s85 = sphi 0, %s84
      %s99 = sphi 0, %s85
      %s103 = sphi 0, %s103
      %s105 = sphi 0, %s103
      %s106 = sphi 0, %s105
      %s120 = sphi 0, %s106
      %s128 = sphi 0, %s130
      %s131 = sphi 0, %s128
      %s132 = sphi 0, %s131
      %s148 = sphi 0, %s132
    $region4: #{tpu_custom_call.1} parent=1 // loop_header_branch
      %16 = sbr.rel (%p14) target = $region8
    $region5: #{tpu_custom_call.1} parent=1 // loop_body
      %s18 = ssub.s32 %s13, 1
      %s19 = ssub.s32 %s13, 2
      %s26 = sadd.s32 1, %s21
      %p27 = scmp.ge.s32.totalorder %s26, 1
      %s28 = scalar_select %p27, 0, %s26
      %s29 = sadd.s32 1, %s20
      %s30 = scalar_select %p27, %s29, %s20
      %p31 = scmp.ge.s32.totalorder %s30, 2
      %s32 = scalar_select %p31, 0, %s30
      %s33 = ssub.s32 %s20, %s32
      %s34 = ssub.s32 %s21, %s28
      %s35 = sor.u32 %s33, %s34
      %p36 = scmp.eq.s32.totalorder %s35, 0
      %s38 = sadd.s32 %s37, 1
      %s39 = scalar_select %p36, %s37, %s38
      %p42 = pneg %p36
      %p43 = scmp.eq.s32.totalorder %s13, 1
      %p44 = por %p42, %p43
      %p45 = scmp.ne.s32.totalorder %s37, %s40
      %p46 = scmp.eq.s32.totalorder %s13, 0
      %p47 = por %p45, %p46
      %p48 = scmp.ne.s32.totalorder %s37, %s40
      %p49 = scmp.eq.s32.totalorder %s18, 1
      %p50 = por %p48, %p49
      %p51 = scmp.ne.s32.totalorder %s40, %s41
      %p52 = scmp.eq.s32.totalorder %s18, 0
      %p53 = por %p51, %p52
      %p54 = scmp.ne.s32.totalorder %s40, %s41
      %p55 = scmp.eq.s32.totalorder %s19, 1
      %p56 = por %p54, %p55
      %p58 = scmp.ne.s32.totalorder %s41, %s57
      %p59 = scmp.eq.s32.totalorder %s19, 0
      %p60 = por %p58, %p59
      %s62 = sadd.s32 %s61, 1
      %p65 = scmp.eq.s32.totalorder %s13, 1
      %p66 = scmp.ne.s32.totalorder %s61, %s63
      %p67 = scmp.eq.s32.totalorder %s13, 0
      %p68 = por %p66, %p67
      %p69 = scmp.ne.s32.totalorder %s61, %s63
      %p70 = scmp.eq.s32.totalorder %s18, 1
      %p71 = por %p69, %p70
      %p72 = scmp.ne.s32.totalorder %s63, %s64
      %p73 = scmp.eq.s32.totalorder %s18, 0
      %p74 = por %p72, %p73
      %p75 = scmp.ne.s32.totalorder %s63, %s64
      %p76 = scmp.eq.s32.totalorder %s19, 1
      %p77 = por %p75, %p76
      %p79 = scmp.ne.s32.totalorder %s64, %s78
      %p80 = scmp.eq.s32.totalorder %s19, 0
      %p81 = por %p79, %p80
      %s83 = sadd.s32 %s82, 1
      %p86 = scmp.eq.s32.totalorder %s13, 1
      %p87 = scmp.ne.s32.totalorder %s82, %s84
      %p88 = scmp.eq.s32.totalorder %s13, 0
      %p89 = por %p87, %p88
      %p90 = scmp.ne.s32.totalorder %s82, %s84
      %p91 = scmp.eq.s32.totalorder %s18, 1
      %p92 = por %p90, %p91
      %p93 = scmp.ne.s32.totalorder %s84, %s85
      %p94 = scmp.eq.s32.totalorder %s18, 0
      %p95 = por %p93, %p94
      %p96 = scmp.ne.s32.totalorder %s84, %s85
      %p97 = scmp.eq.s32.totalorder %s19, 1
      %p98 = por %p96, %p97
      %p100 = scmp.ne.s32.totalorder %s85, %s99
      %p101 = scmp.eq.s32.totalorder %s19, 0
      %p102 = por %p100, %p101
      %s104 = sadd.s32 %s103, 1
      %p107 = scmp.eq.s32.totalorder %s13, 1
      %p108 = scmp.ne.s32.totalorder %s103, %s105
      %p109 = scmp.eq.s32.totalorder %s13, 0
      %p110 = por %p108, %p109
      %p111 = scmp.ne.s32.totalorder %s103, %s105
      %p112 = scmp.eq.s32.totalorder %s18, 1
      %p113 = por %p111, %p112
      %p114 = scmp.ne.s32.totalorder %s105, %s106
      %p115 = scmp.eq.s32.totalorder %s18, 0
      %p116 = por %p114, %p115
      %p117 = scmp.ne.s32.totalorder %s105, %s106
      %p118 = scmp.eq.s32.totalorder %s19, 1
      %p119 = por %p117, %p118
      %p121 = scmp.ne.s32.totalorder %s106, %s120
      %p122 = scmp.eq.s32.totalorder %s19, 0
      %p123 = por %p121, %p122
      %s124 = ssub.s32 %s20, %s32
      %s125 = ssub.s32 %s21, %s28
      %s126 = sor.u32 %s124, %s125
      %p127 = scmp.eq.s32.totalorder %s126, 0
      %s129 = sadd.s32 %s128, 1
      %s130 = scalar_select %p127, %s128, %s129
      %p133 = pneg %p127
      %p134 = scmp.eq.s32.totalorder %s13, 1
      %p135 = por %p133, %p134
      %p136 = scmp.ne.s32.totalorder %s128, %s131
      %p137 = scmp.eq.s32.totalorder %s13, 0
      %p138 = por %p136, %p137
      %p139 = scmp.ne.s32.totalorder %s128, %s131
      %p140 = scmp.eq.s32.totalorder %s18, 1
      %p141 = por %p139, %p140
      %p142 = scmp.ne.s32.totalorder %s131, %s132
      %p143 = scmp.eq.s32.totalorder %s18, 0
      %p144 = por %p142, %p143
      %p145 = scmp.ne.s32.totalorder %s131, %s132
      %p146 = scmp.eq.s32.totalorder %s19, 1
      %p147 = por %p145, %p146
      %p149 = scmp.ne.s32.totalorder %s132, %s148
      %p150 = scmp.eq.s32.totalorder %s19, 0
      %p151 = por %p149, %p150
      %p152 = scmp.le.s32.totalorder 1, %s13
      %p153 = scmp.lt.s32.totalorder %s13, 3
      %p154 = pnand %p152, %p153
      %p155 = pneg %p154
      // Predicated region
      $region9: #{tpu_custom_call.1} parent=5 // pred_check
        _
      $region10: #{tpu_custom_call.1} parent=5 // pred_check_branch
        %157 = sbr.rel (%p154) target = $region12
      $region11: #{tpu_custom_call.1} parent=5 // pred_region
        %s158 = ssub.s32 %s13, 1
        // Predicated region
        $region13: #{tpu_custom_call.1} parent=11 // pred_check
          %p159 = pneg %p74
        $region14: #{tpu_custom_call.1} parent=11 // pred_check_branch
          %161 = sbr.rel (%p159) target = $region16
        $region15: #{tpu_custom_call.1} parent=11 // pred_region
          _
        $region16: #{tpu_custom_call.1} parent=11 // pred_fallthru
          _
        // Predicated region
        $region17: #{tpu_custom_call.1} parent=11 // pred_check
          %p162 = pneg %p95
        $region18: #{tpu_custom_call.1} parent=11 // pred_check_branch
          %164 = sbr.rel (%p162) target = $region20
        $region19: #{tpu_custom_call.1} parent=11 // pred_region
          _
        $region20: #{tpu_custom_call.1} parent=11 // pred_fallthru
          _
        // Predicated region
        $region21: #{tpu_custom_call.1} parent=11 // pred_check
          %p165 = pneg %p116
        $region22: #{tpu_custom_call.1} parent=11 // pred_check_branch
          %167 = sbr.rel (%p165) target = $region24
        $region23: #{tpu_custom_call.1} parent=11 // pred_region
          _
        $region24: #{tpu_custom_call.1} parent=11 // pred_fallthru
          _
      $region12: #{tpu_custom_call.1} parent=5 // pred_fallthru
        _
      %p168 = scmp.lt.s32.totalorder %s13, 2
      // Predicated region
      $region25: #{tpu_custom_call.1} parent=5 // pred_check
        %p169 = pneg %p168
      $region26: #{tpu_custom_call.1} parent=5 // pred_check_branch
        %171 = sbr.rel (%p169) target = $region28
      $region27: #{tpu_custom_call.1} parent=5 // pred_region
        // Predicated region
        $region29: #{tpu_custom_call.1} parent=27 // pred_check
          %p172 = pneg %p47
        $region30: #{tpu_custom_call.1} parent=27 // pred_check_branch
          %174 = sbr.rel (%p172) target = $region32
        $region31: #{tpu_custom_call.1} parent=27 // pred_region
          %p175 = scmp.lt.s32.totalorder %s20, 1
          %s176 = scalar_select %p175, %s20, 1
          %p177 = scmp.lt.s32.totalorder %s21, 0
          %s178 = scalar_select %p177, %s21, 0
          %s179 = smul.addr %s176, 5
          %s180 = sadd.s32 %s178, %s179
          %s181 = smul.addr %s180, 8
          %s182 = scalar_lea.vmem %s0, %s181
        $region32: #{tpu_custom_call.1} parent=27 // pred_fallthru
          _
      $region28: #{tpu_custom_call.1} parent=5 // pred_fallthru
        _
      %p183 = scmp.le.s32.totalorder 1, %s13
      %p184 = scmp.lt.s32.totalorder %s13, 3
      %p185 = pnand %p183, %p184
      %p186 = pneg %p185
      // Predicated region
      $region33: #{tpu_custom_call.1} parent=5 // pred_check
        _
      $region34: #{tpu_custom_call.1} parent=5 // pred_check_branch
        %188 = sbr.rel (%p185) target = $region36
      $region35: #{tpu_custom_call.1} parent=5 // pred_region
        %s189 = ssub.s32 %s13, 1
        %p190 = scmp.lt.s32.totalorder %s22, 1
        %s191 = scalar_select %p190, %s22, 1
        %p192 = scmp.lt.s32.totalorder %s23, 0
        %s193 = scalar_select %p192, %s23, 0
        %s194 = smul.addr %s191, 5
        %s195 = sadd.s32 %s193, %s194
        %s196 = smul.addr %s195, 8
        %s197 = scalar_lea.vmem %s0, %s196
        %p198 = pneg %p53
        %p199 = pneg %p50
        %p200 = pneg %p74
        %p201 = pneg %p71
        %p202 = pneg %p95
        %p203 = pneg %p92
        %p204 = pneg %p116
        %p205 = pneg %p113
        %p206 = pneg %p144
        %p207 = pneg %p141
        %s208 = sand.u32 %s131, 1
        %s209 = scalar_lea.sflag [#allocation3], %s208
        %s210 = sand.u32 %s131, 1
        %s211 = smul.addr %s210, 8
        %s212 = scalar_lea.vmem [#allocation2], %s211
        %p213 = scmp.lt.s32.totalorder %s22, 1
        %s214 = scalar_select %p213, %s22, 1
        %p215 = scmp.lt.s32.totalorder %s23, 0
        %s216 = scalar_select %p215, %s23, 0
        %s217 = smul.addr %s214, 5
        %s218 = sadd.s32 %s216, %s217
        %s219 = smul.addr %s218, 8
        %s220 = scalar_lea.vmem %s0, %s219
        %v221 = vld [vmem:[%s220] sm:$0xff]
        %v222 = vld [vmem:[%s220 + $0x8] sm:$0xff]
        %v223 = vld [vmem:[%s220 + $0x10] sm:$0xff]
        %v224 = vld [vmem:[%s220 + $0x18] sm:$0xff]
        %v225 = vld [vmem:[%s220 + $0x20] sm:$0xf]
        %v226 = vld [vmem:[%s3] sm:$0xff]
        %v227 = vld [vmem:[%s1] sm:$0xf]
        %229 = vset.pattern.permute.xlu0 0
        %230 = vperm.xlu0 %229, %v226
        %v231 = vpop.permute.xlu0 %230
        %vm233 = vcmask 293888
        %v235 = vsel %vm233, %v227, 0
        %vm237 = vcmask 1043456
        %v239 = vsel %vm237, %v225, 0
        %241 = vmatpush.msra.mxu0 0.0
        %242 = vmatpush.msra.mxu0 0.0
        %243 = vmatpush.msra.mxu0 0.0
        %244 = vmatpush.msra.mxu0 0.0
        %245 = vmatpush.msra.mxu0 0.0
        %246 = vmatpush.msra.mxu0 0.0
        %247 = vmatpush.msra.mxu0 0.0
        %248 = vmatpush.msra.mxu0 0.0
        %249 = vmatpush.msra.mxu0 0.0
        %250 = vmatpush.msra.mxu0 0.0
        %251 = vmatpush.msra.mxu0 0.0
        %252 = vmatpush.msra.mxu0 %v239
        %253 = vmatpush.msra.mxu0 %v224
        %254 = vmatpush.msra.mxu0 %v223
        %255 = vmatpush.msra.mxu0 %v222
        %256 = vmatpush.msra.mxu0 %v221
        %257 = vmatmul.f32.gmra.mxu0 %v235
        %v258 = vpop.f32.mrf.mxu0
        %v259 = vadd.f32 %v231, %v258
        %260 = vdwg.mxu0
        %v261 = vmax.f32 %v259, 0.0
        %vm262 = vcmask 519168
        %263 = vst.msk [vmem:[%s212] sm:$0xf] %vm262, %v261
        %v264 = vld [vmem:[%s2] sm:$0xff]
        %v266 = vrot.slane %v223, 4
        %v268 = vmax.f32 %v223, %v266
        %v269 = vrot.slane %v225, 4
        %v271 = vmax.f32 %v224, %v269
        %v273 = vrot.slane %v271, 4
        %v275 = vmax.f32 %v268, %v273
        %277 = vset.pattern.permute.xlu0 0
        %278 = vperm.xlu0 %277, %v264
        %v279 = vpop.permute.xlu0 %278
        %v280 = vrot.slane %v279, 4
        %v282 = vmul.f32 %v275, %v280
        %v283 = vrot.slane %v231, 4
        %v285 = vadd.f32 %v282, %v283
        %v286 = vmax.f32 %v285, 0.0
        %287 = vst.msk [vmem:[%s212 + $0x4] sm:$0xf] %vm262, %v286
        %s288 = sand.u32 %s131, 1
        %s289 = scalar_lea.sflag [#allocation3], %s288
        %s290 = sand.u32 %s131, 1
        %s291 = smul.addr %s290, 8
        %s292 = scalar_lea.vmem [#allocation2], %s291
        // Predicated region
        $region37: #{tpu_custom_call.1} parent=35 // pred_check
          %p293 = pneg %p141
        $region38: #{tpu_custom_call.1} parent=35 // pred_check_branch
          %295 = sbr.rel (%p293) target = $region40
        $region39: #{tpu_custom_call.1} parent=35 // pred_region
          %297 = vsyncadd %s289, 0
          %s298 = sadd.s32 %s23, %s22
          %s299 = smul.addr %s298, 8
          %s300 = scalar_lea.hbm %s4, %s299
          %s302 = sshll.u32 %s292, 4
          %s303 = int_to_ptr.vmem [resolvable:$true] %s302
          %s304 = sshll.u32 %s300, 4
          %s305 = int_to_ptr.hbm [resolvable:$true] %s304
          %307 = dma.vmem_to_hbm [thread:$0]  %s303, 128, %s305, %s289
        $region40: #{tpu_custom_call.1} parent=35 // pred_fallthru
          _
      $region36: #{tpu_custom_call.1} parent=5 // pred_fallthru
        _
      %p308 = scmp.le.s32.totalorder 2, %s13
      // Predicated region
      $region41: #{tpu_custom_call.1} parent=5 // pred_check
        %p309 = pneg %p308
      $region42: #{tpu_custom_call.1} parent=5 // pred_check_branch
        %311 = sbr.rel (%p309) target = $region44
      $region43: #{tpu_custom_call.1} parent=5 // pred_region
        %s312 = ssub.s32 %s13, 2
        // Predicated region
        $region45: #{tpu_custom_call.1} parent=43 // pred_check
          %p313 = pneg %p147
        $region46: #{tpu_custom_call.1} parent=43 // pred_check_branch
          %315 = sbr.rel (%p313) target = $region48
        $region47: #{tpu_custom_call.1} parent=43 // pred_region
          %s316 = sand.u32 %s132, 1
          %s317 = scalar_lea.sflag [#allocation3], %s316
          %s318 = sand.u32 %s132, 1
          %s319 = smul.addr %s318, 8
          %s320 = scalar_lea.vmem [#allocation2], %s319
          %322 = dma.done %s317, 128
        $region48: #{tpu_custom_call.1} parent=43 // pred_fallthru
          _
      $region44: #{tpu_custom_call.1} parent=5 // pred_fallthru
        _
    $region6: #{tpu_custom_call.1} parent=1 // loop_footer
      %s17 = sadd.s32 1, %s13
    $region7: #{tpu_custom_call.1} parent=1 // loop_footer_branch
      %12 = sbr.rel target = $region3
    $region8: #{tpu_custom_call.1} parent=1 // loop_exit
      _
    %323 = vsyncpa [#allocation3], 1
    %s324 = scalar_lea.sflag [#allocation3], 1
    %325 = vsyncpa %s324, 1

</llo_original>
